<compile_context>
chip_gen: v7x
topology: tpu7x:2x2x1
jax: 0.10.0
libtpu: 0.0.40
codegen_flags: <defaults>
</compile_context>

<pallas_src>
import math

import jax
import jax.numpy as jnp
from jax import lax
from jax.experimental import pallas as pl
from jax.experimental.pallas import tpu as pltpu

_INV_SQRT2 = 1.0 / math.sqrt(2.0)


def _head_kernel(x_ref, w1_ref, b1_ref, w2_ref, b2_ref, o_ref):
    # x_ref:  [TB, H]   CLS feature tile (caller dtype)
    # w1_ref: [H, H]    compute dtype (bf16 by default)    b1_ref: [1, H]    f32
    # w2_ref: [H, Lp]   compute dtype                      b2_ref: [1, Lp]   f32
    # o_ref:  [TB, Lp]  caller dtype
    x = x_ref[...].astype(w1_ref.dtype)  # feed the MXU native (bf16) operands

    # dense: x @ W1 (MXU, f32 accumulation); bias add + GELU in f32.
    h = jnp.dot(x, w1_ref[...], preferred_element_type=jnp.float32)
    h = h + b1_ref[...]

    # exact erf-based GELU (matches torch.nn.functional.gelu default)
    g = 0.5 * h * (1.0 + lax.erf(h * _INV_SQRT2))

    # out_proj: cast to w2's dtype (not x's) so bf16-weight callers stay on the
    # fast MXU path even with f32 features.
    o = jnp.dot(g.astype(w2_ref.dtype), w2_ref[...],
                preferred_element_type=jnp.float32)
    o = o + b2_ref[...]

    o_ref[...] = o.astype(o_ref.dtype)


def _round_up(x, m):
    return ((x + m - 1) // m) * m


def relation_classification_head(features, w1, b1, w2, b2, *,
                                 block_b=512, compute_dtype=jnp.bfloat16):
    """features: [B, S, H]; w1: [H, H] (in,out); b1: [H]; w2: [H, L]; b2: [L] -> [B, L]."""
    B, S, H = features.shape
    L = w2.shape[1]
    f_itemsize = features.dtype.itemsize
    c_itemsize = jnp.dtype(compute_dtype).itemsize

    # Lane-dense output: pad num_labels to exactly the next multiple of 128.
    L_pad = _round_up(L, 128)
    if L_pad != L:
        w2 = jnp.pad(w2, ((0, 0), (0, L_pad - L)))
        b2 = jnp.pad(b2, (0, L_pad - L))

    # Weights in compute dtype (bf16 MXU + half the weight DMA/VMEM residency);
    # biases stay f32 (f32 bias add + GELU inside the kernel).
    w1_c = w1.astype(compute_dtype)
    w2_c = w2.astype(compute_dtype)
    b1_2d = b1.astype(jnp.float32).reshape(1, H)
    b2_2d = b2.astype(jnp.float32).reshape(1, L_pad)

    # CLS gather: for lane-aligned, reasonably wide rows express the seq-0 gather in
    # the BlockSpec on a [B, S*H] view (free reshape, no extra HBM round trip).
    # For tiny (<~1 KiB) or unaligned rows, pre-slice in the wrapper instead.
    use_view_gather = (S > 1) and (H % 128 == 0) and (H * f_itemsize >= 1024)
    x2d = features.reshape(B, S * H) if use_view_gather else features[:, 0, :]

    # ---- batch-tile selection -------------------------------------------------
    w_bytes = (H * H + H * L_pad) * c_itemsize
    act_bytes_per_row = (H + L_pad) * f_itemsize

    TB = B if B <= block_b else block_b  # block_b is a multiple of 8
    # Megacore (v7x): only force >=2 grid steps when activation traffic dominates
    # the per-core-replicated weight fetch; small weight-bound calls keep grid=1.
    if B > 8 and B * act_bytes_per_row > 2 * w_bytes:
        TB = min(TB, _round_up(pl.cdiv(B, 2), 8))

    # VMEM budget guard (v7x: 64 MiB/TC physical; v5e scoped default 16 MiB):
    # shrink the batch tile until the estimate fits, then request that much VMEM.
    def _vmem_estimate(tb):
        return (2 * tb * H * f_itemsize           # double-buffered x tiles
                + 2 * tb * L_pad * f_itemsize     # double-buffered out tiles
                + 2 * w_bytes                     # resident weights (x2: buffering)
                + 2 * (H + L_pad) * 4)            # biases (f32)

    VMEM_BUDGET = 48 * 1024 * 1024
    while TB > 8 and _vmem_estimate(TB) > VMEM_BUDGET:
        TB = max(8, _round_up(TB // 2, 8))
    # TODO(synk): if the resident weights alone exceed the budget (very large H with
    # f32 compute), a K-tiled reduction grid with an f32 VMEM accumulator is needed.

    vmem_limit = int(min(64 * 1024 * 1024,
                         max(32 * 1024 * 1024, 2 * _vmem_estimate(TB))))

    grid = (pl.cdiv(B, TB),)

    cost = pl.CostEstimate(
        flops=2 * B * H * (H + L_pad),
        transcendentals=B * H,
        bytes_accessed=(B * H * f_itemsize                 # CLS activations in
                        + (H * H + H * L_pad) * c_itemsize  # weights (compute dtype)
                        + (H + L_pad) * 4                   # biases
                        + B * L_pad * f_itemsize),          # output
    )

    out = pl.pallas_call(
        _head_kernel,
        out_shape=jax.ShapeDtypeStruct((B, L_pad), features.dtype),
        grid=grid,
        in_specs=[
            pl.BlockSpec((TB, H), lambda i: (i, 0)),       # CLS rows only, pipelined
            pl.BlockSpec((H, H), lambda i: (0, 0)),        # W1: VMEM-resident
            pl.BlockSpec((1, H), lambda i: (0, 0)),        # b1
            pl.BlockSpec((H, L_pad), lambda i: (0, 0)),    # W2 (padded): resident
            pl.BlockSpec((1, L_pad), lambda i: (0, 0)),    # b2 (padded)
        ],
        out_specs=pl.BlockSpec((TB, L_pad), lambda i: (i, 0)),
        compiler_params=pltpu.CompilerParams(
            dimension_semantics=("parallel",),
            vmem_limit_bytes=vmem_limit),
        cost_estimate=cost,
    )(x2d, w1_c, b1_2d, w2_c, b2_2d)

    return out[:, :L]


def _reference_matched(features, w1, b1, w2, b2, compute_dtype=jnp.bfloat16):
    """Same dtype path as the kernel (bf16 MXU operands, f32 accumulation/bias/GELU)."""
    x = features[:, 0, :].astype(compute_dtype)
    h = jnp.dot(x, w1.astype(compute_dtype), preferred_element_type=jnp.float32)
    h = h + b1.astype(jnp.float32)
    g = 0.5 * h * (1.0 + lax.erf(h * _INV_SQRT2))
    o = jnp.dot(g.astype(compute_dtype), w2.astype(compute_dtype),
                preferred_element_type=jnp.float32)
    return (o + b2.astype(jnp.float32)).astype(features.dtype)


def _reference_exact(features, w1, b1, w2, b2):
    """Full-f32 reference of the PyTorch module (loose sanity check for bf16 path)."""
    x = features[:, 0, :].astype(jnp.float32)
    h = x @ w1.astype(jnp.float32) + b1.astype(jnp.float32)
    g = 0.5 * h * (1.0 + lax.erf(h * _INV_SQRT2))
    return (g @ w2.astype(jnp.float32) + b2.astype(jnp.float32)).astype(features.dtype)


if __name__ == "__main__":
    # Small, module-consistent shapes: batch=2, seq=8, hidden=128, num_labels=4.
    B, S, H, L = 2, 8, 128, 4

    key = jax.random.PRNGKey(0)
    k_feat, k_w1, k_b1, k_w2, k_b2 = jax.random.split(key, 5)

    features = jax.random.normal(k_feat, (B, S, H), dtype=jnp.float32)

    # Deterministic parameter init; weights generated directly in the transposed
    # [in, out] form used by the kernel (PyTorch Linear stores [out, in]).
    w1 = jax.random.normal(k_w1, (H, H), dtype=jnp.float32) * (1.0 / math.sqrt(H))
    b1 = jax.random.normal(k_b1, (H,), dtype=jnp.float32) * 0.01
    w2 = jax.random.normal(k_w2, (H, L), dtype=jnp.float32) * (1.0 / math.sqrt(H))
    b2 = jax.random.normal(k_b2, (L,), dtype=jnp.float32) * 0.01

    # TODO(synk): dropout layers are identity at inference; no RNG masking implemented.
    out = relation_classification_head(features, w1, b1, w2, b2)
    out = jax.block_until_ready(out)
    assert out.shape == (B, L)

    # Tight check vs a reference that follows the kernel's dtype path exactly.
    ref_m = _reference_matched(features, w1, b1, w2, b2)
    assert jnp.allclose(out, ref_m, atol=1e-3, rtol=1e-3), "mismatch vs matched ref"

    # Loose sanity check vs the exact-f32 PyTorch-equivalent math (bf16 rounding).
    ref_f32 = _reference_exact(features, w1, b1, w2, b2)
    assert jnp.allclose(out, ref_f32, atol=5e-2, rtol=5e-2), "mismatch vs f32 ref"

    print("KERNEL_OK")
</pallas_src>

<mosaic_0001>
module attributes {stable_mosaic.version = 11 : i64} {
  func.func @_head_kernel(%arg0: i32, %arg1: memref<2x128xf32, #tpu.memory_space<vmem>>, %arg2: memref<128x128xbf16, #tpu.memory_space<vmem>>, %arg3: memref<1x128xf32, #tpu.memory_space<vmem>>, %arg4: memref<128x128xbf16, #tpu.memory_space<vmem>>, %arg5: memref<1x128xf32, #tpu.memory_space<vmem>>, %arg6: memref<2x128xf32, #tpu.memory_space<vmem>>) attributes {dimension_semantics = [#tpu.dimension_semantics<parallel>], iteration_bounds = array<i64: 1>, scalar_prefetch = 0 : i64, scratch_operands = 0 : i64, tpu.core_type = #tpu.core_type<tc>, window_params = [{transform_indices = @transform_0, window_bounds = array<i64: 2, 128>}, {pipeline_mode = #tpu.pipeline_mode<synchronous>, transform_indices = @transform_1, window_bounds = array<i64: 128, 128>}, {pipeline_mode = #tpu.pipeline_mode<synchronous>, transform_indices = @transform_2, window_bounds = array<i64: 1, 128>}, {pipeline_mode = #tpu.pipeline_mode<synchronous>, transform_indices = @transform_3, window_bounds = array<i64: 128, 128>}, {pipeline_mode = #tpu.pipeline_mode<synchronous>, transform_indices = @transform_4, window_bounds = array<i64: 1, 128>}, {transform_indices = @transform_5, window_bounds = array<i64: 2, 128>}]} {
    %c0 = arith.constant 0 : index
    %c0_0 = arith.constant 0 : index
    %0 = vector.load %arg1[%c0, %c0_0] : memref<2x128xf32, #tpu.memory_space<vmem>>, vector<2x128xf32>
    %1 = arith.truncf %0 : vector<2x128xf32> to vector<2x128xbf16>
    %c0_1 = arith.constant 0 : index
    %c0_2 = arith.constant 0 : index
    %2 = vector.load %arg2[%c0_1, %c0_2] : memref<128x128xbf16, #tpu.memory_space<vmem>>, vector<128x128xbf16>
    %cst = arith.constant dense<0.000000e+00> : vector<2x128xf32>
    %3 = tpu.matmul %1, %2, %cst {dimension_numbers = #tpu.dot_dimension_numbers<[1], [0], [0], [1], [0, 0, 1, 1], [], []>} : vector<2x128xbf16>, vector<128x128xbf16>, vector<2x128xf32> -> vector<2x128xf32>
    %c0_3 = arith.constant 0 : index
    %c0_4 = arith.constant 0 : index
    %4 = vector.load %arg3[%c0_3, %c0_4] : memref<1x128xf32, #tpu.memory_space<vmem>>, vector<1x128xf32>
    %5 = vector.broadcast %4 : vector<1x128xf32> to vector<2x128xf32>
    %6 = arith.addf %3, %5 : vector<2x128xf32>
    %cst_5 = arith.constant 5.000000e-01 : f32
    %7 = vector.broadcast %cst_5 : f32 to vector<2x128xf32>
    %8 = arith.mulf %7, %6 : vector<2x128xf32>
    %cst_6 = arith.constant 0.707106769 : f32
    %9 = vector.broadcast %cst_6 : f32 to vector<2x128xf32>
    %10 = arith.mulf %6, %9 : vector<2x128xf32>
    %11 = math.erf %10 : vector<2x128xf32>
    %cst_7 = arith.constant 1.000000e+00 : f32
    %12 = vector.broadcast %cst_7 : f32 to vector<2x128xf32>
    %13 = arith.addf %12, %11 : vector<2x128xf32>
    %14 = arith.mulf %8, %13 : vector<2x128xf32>
    %15 = arith.truncf %14 : vector<2x128xf32> to vector<2x128xbf16>
    %c0_8 = arith.constant 0 : index
    %c0_9 = arith.constant 0 : index
    %16 = vector.load %arg4[%c0_8, %c0_9] : memref<128x128xbf16, #tpu.memory_space<vmem>>, vector<128x128xbf16>
    %cst_10 = arith.constant dense<0.000000e+00> : vector<2x128xf32>
    %17 = tpu.matmul %15, %16, %cst_10 {dimension_numbers = #tpu.dot_dimension_numbers<[1], [0], [0], [1], [0, 0, 1, 1], [], []>} : vector<2x128xbf16>, vector<128x128xbf16>, vector<2x128xf32> -> vector<2x128xf32>
    %c0_11 = arith.constant 0 : index
    %c0_12 = arith.constant 0 : index
    %18 = vector.load %arg5[%c0_11, %c0_12] : memref<1x128xf32, #tpu.memory_space<vmem>>, vector<1x128xf32>
    %19 = vector.broadcast %18 : vector<1x128xf32> to vector<2x128xf32>
    %20 = arith.addf %17, %19 : vector<2x128xf32>
    %c0_13 = arith.constant 0 : index
    %c0_14 = arith.constant 0 : index
    %21 = vector.load %arg6[%c0_13, %c0_14] : memref<2x128xf32, #tpu.memory_space<vmem>>, vector<2x128xf32>
    tpu.vector_store %arg6[%c0_13, %c0_14], %20 {strides = array<i32>} : memref<2x128xf32, #tpu.memory_space<vmem>>, vector<2x128xf32>,
    return
  }
  func.func @transform_0(%arg0: i32) -> (i32, i32) {
    %c0_i32 = arith.constant 0 : i32
    %c0_i32_0 = arith.constant 0 : i32
    return %arg0, %c0_i32 : i32, i32
  }
  func.func @transform_1(%arg0: i32) -> (i32, i32) {
    %c0_i32 = arith.constant 0 : i32
    %c0_i32_0 = arith.constant 0 : i32
    %c0_i32_1 = arith.constant 0 : i32
    return %c0_i32, %c0_i32_0 : i32, i32
  }
  func.func @transform_2(%arg0: i32) -> (i32, i32) {
    %c0_i32 = arith.constant 0 : i32
    %c0_i32_0 = arith.constant 0 : i32
    %c0_i32_1 = arith.constant 0 : i32
    return %c0_i32, %c0_i32_0 : i32, i32
  }
  func.func @transform_3(%arg0: i32) -> (i32, i32) {
    %c0_i32 = arith.constant 0 : i32
    %c0_i32_0 = arith.constant 0 : i32
    %c0_i32_1 = arith.constant 0 : i32
    return %c0_i32, %c0_i32_0 : i32, i32
  }
  func.func @transform_4(%arg0: i32) -> (i32, i32) {
    %c0_i32 = arith.constant 0 : i32
    %c0_i32_0 = arith.constant 0 : i32
    %c0_i32_1 = arith.constant 0 : i32
    return %c0_i32, %c0_i32_0 : i32, i32
  }
  func.func @transform_5(%arg0: i32) -> (i32, i32) {
    %c0_i32 = arith.constant 0 : i32
    %c0_i32_0 = arith.constant 0 : i32
    return %arg0, %c0_i32 : i32, i32
  }
}

</mosaic_0001>

<llo_original>
// kernel: tpu_custom_call.1
$region0: #{tpu_custom_call.1}
  #allocation0 [shape = 'u32[]', space=smem, size = 0x4, offset = 0x4, fixed_abs, tag = 'smem constant byte address 0x4 - core index']
  #allocation1 [shape = 'u32[144,128]{1,0:T(1,128)}', space=vmem, size = 0x12000, scoped, tag = 'internal scratch']
  %s0 = inlined_call_operand.hbm [shape: f32[2,128], index: 0, kind: input, shape index: {}]
  %s1 = inlined_call_operand.hbm [shape: bf16[128,128], index: 1, kind: input, shape index: {}]
  %s2 = inlined_call_operand.vmem [shape: f32[1,128], index: 2, kind: input, shape index: {}]
  %s3 = inlined_call_operand.hbm [shape: bf16[128,128], index: 3, kind: input, shape index: {}]
  %s4 = inlined_call_operand.vmem [shape: f32[1,128], index: 4, kind: input, shape index: {}]
  %s5 = inlined_call_operand.hbm [shape: f32[2,128], index: 5, kind: output, shape index: {}]
  %s6 = sld [smem:[#allocation0]]
  $region42: #{tpu_custom_call.1} parent=0
    _
  %s8 = ssub.s32 1, %s6
  %s9 = scalar_select 0, %s8, %s6
  $region1: #{tpu_custom_call.1} parent=0
    #allocation2 [shape = 'u8[1024]{0}', space=vmem, size = 0x400, scoped, tag = 'input window, operand 0, single buffered']
    #allocation3 [shape = 's32[1]{0}', space=sflag, size = 0x4, scoped, tag = 'scoped memory for tpu_custom_call.1']
    #allocation4 [shape = 's32[1]{0}', space=sflag, size = 0x4, scoped, tag = 'scoped memory for tpu_custom_call.1']
    #allocation5 [shape = 'u8[32768]{0}', space=vmem, size = 0x8000, scoped, tag = 'input window, operand 1, single buffered']
    #allocation6 [shape = 's32[1]{0}', space=sflag, size = 0x4, scoped, tag = 'scoped memory for tpu_custom_call.1']
    #allocation7 [shape = 'u8[32768]{0}', space=vmem, size = 0x8000, scoped, tag = 'input window, operand 3, single buffered']
    #allocation8 [shape = 'u8[1024]{0}', space=vmem, size = 0x400, scoped, tag = 'output window, operand 0, single buffered']
    %10 = vsyncpa [#allocation3], 0
    %11 = vsyncpa [#allocation6], 0
    %12 = vsyncpa [#allocation4], 0
    // Predicated region
    $region2: #{tpu_custom_call.1} parent=1 // pred_check
      _
    $region3: #{tpu_custom_call.1} parent=1 // pred_check_branch
      %14 = sbr.rel (0) target = $region5
    $region4: #{tpu_custom_call.1} parent=1 // pred_region
      %s16 = ssub.s32 32, 32
      %17 = vsyncadd [#allocation3], %s16
      %s19 = sshll.u32 [#allocation2], 4
      %s20 = int_to_ptr.vmem [resolvable:$true] %s19
      %22 = dma.hbm_to_vmem [thread:$0]  %s0, 32, %s20, [#allocation3]
    $region5: #{tpu_custom_call.1} parent=1 // pred_fallthru
      _
    // Predicated region
    $region6: #{tpu_custom_call.1} parent=1 // pred_check
      _
    $region7: #{tpu_custom_call.1} parent=1 // pred_check_branch
      %24 = sbr.rel (0) target = $region9
    $region8: #{tpu_custom_call.1} parent=1 // pred_region
      %s26 = ssub.s32 1024, 1024
      %27 = vsyncadd [#allocation6], %s26
      %s28 = sshll.u32 [#allocation5], 4
      %s29 = int_to_ptr.vmem [resolvable:$true] %s28
      %34 = dma.hbm_to_vmem [thread:$0]  %s1, 1024, %s29, [#allocation6], 64, 64, 4
    $region9: #{tpu_custom_call.1} parent=1 // pred_fallthru
      _
    // Predicated region
    $region10: #{tpu_custom_call.1} parent=1 // pred_check
      _
    $region11: #{tpu_custom_call.1} parent=1 // pred_check_branch
      %36 = sbr.rel (0) target = $region13
    $region12: #{tpu_custom_call.1} parent=1 // pred_region
      _
    $region13: #{tpu_custom_call.1} parent=1 // pred_fallthru
      _
    // Predicated region
    $region14: #{tpu_custom_call.1} parent=1 // pred_check
      _
    $region15: #{tpu_custom_call.1} parent=1 // pred_check_branch
      %38 = sbr.rel (0) target = $region17
    $region16: #{tpu_custom_call.1} parent=1 // pred_region
      %s40 = ssub.s32 1024, 1024
      %41 = vsyncadd [#allocation6], %s40
      %s42 = sshll.u32 [#allocation7], 4
      %s43 = int_to_ptr.vmem [resolvable:$true] %s42
      %48 = dma.hbm_to_vmem [thread:$0]  %s3, 1024, %s43, [#allocation6], 64, 64, 4
    $region17: #{tpu_custom_call.1} parent=1 // pred_fallthru
      _
    // Predicated region
    $region18: #{tpu_custom_call.1} parent=1 // pred_check
      _
    $region19: #{tpu_custom_call.1} parent=1 // pred_check_branch
      %50 = sbr.rel (0) target = $region21
    $region20: #{tpu_custom_call.1} parent=1 // pred_region
      _
    $region21: #{tpu_custom_call.1} parent=1 // pred_fallthru
      _
    // Predicated region
    $region22: #{tpu_custom_call.1} parent=1 // pred_check
      _
    $region23: #{tpu_custom_call.1} parent=1 // pred_check_branch
      %52 = sbr.rel (0) target = $region25
    $region24: #{tpu_custom_call.1} parent=1 // pred_region
      %53 = dma.done [#allocation3], 32
    $region25: #{tpu_custom_call.1} parent=1 // pred_fallthru
      _
    // Predicated region
    $region26: #{tpu_custom_call.1} parent=1 // pred_check
      _
    $region27: #{tpu_custom_call.1} parent=1 // pred_check_branch
      %55 = sbr.rel (0) target = $region29
    $region28: #{tpu_custom_call.1} parent=1 // pred_region
      %56 = dma.done [#allocation6], 1024
    $region29: #{tpu_custom_call.1} parent=1 // pred_fallthru
      _
    // Predicated region
    $region30: #{tpu_custom_call.1} parent=1 // pred_check
      _
    $region31: #{tpu_custom_call.1} parent=1 // pred_check_branch
      %58 = sbr.rel (0) target = $region33
    $region32: #{tpu_custom_call.1} parent=1 // pred_region
      %59 = dma.done [#allocation6], 1024
    $region33: #{tpu_custom_call.1} parent=1 // pred_fallthru
      _
    %v61 = vld [vmem:[#allocation2] sm:$0x3]
    %v62 = vpack.c.bf16 %v61, %v61
    %v63 = vld [vmem:[#allocation5] sm:$0xf]
    %v64 = vld [vmem:[#allocation5 + $0x4] sm:$0xf]
    %v65 = vld [vmem:[#allocation5 + $0x8] sm:$0xf]
    %v66 = vld [vmem:[#allocation5 + $0xc] sm:$0xf]
    %v67 = vld [vmem:[#allocation5 + $0x10] sm:$0xf]
    %v68 = vld [vmem:[#allocation5 + $0x14] sm:$0xf]
    %v69 = vld [vmem:[#allocation5 + $0x18] sm:$0xf]
    %v70 = vld [vmem:[#allocation5 + $0x1c] sm:$0xf]
    %v71 = vld [vmem:[#allocation5 + $0x20] sm:$0xf]
    %v72 = vld [vmem:[#allocation5 + $0x24] sm:$0xf]
    %v73 = vld [vmem:[#allocation5 + $0x28] sm:$0xf]
    %v74 = vld [vmem:[#allocation5 + $0x2c] sm:$0xf]
    %v75 = vld [vmem:[#allocation5 + $0x30] sm:$0xf]
    %v76 = vld [vmem:[#allocation5 + $0x34] sm:$0xf]
    %v77 = vld [vmem:[#allocation5 + $0x38] sm:$0xf]
    %v78 = vld [vmem:[#allocation5 + $0x3c] sm:$0xf]
    %v79 = vld [vmem:[%s2] sm:$0x1]
    %v81 = vlaneseq
    %v82 = vshrl.u32 %v81, 7
    %v83 = vsub.s32 0, %v82
    %v84 = vrot.slane %v79, %v83
    %v102 = vunpack.c.l.b16 %v63
    %v103 = vunpack.c.l.b16 %v64
    %v104 = vunpack.c.l.b16 %v65
    %v105 = vunpack.c.l.b16 %v66
    %v106 = vunpack.c.l.b16 %v67
    %v107 = vunpack.c.l.b16 %v68
    %v108 = vunpack.c.l.b16 %v69
    %v109 = vunpack.c.l.b16 %v70
    %v110 = vunpack.c.l.b16 %v71
    %v111 = vunpack.c.l.b16 %v72
    %v112 = vunpack.c.l.b16 %v73
    %v113 = vunpack.c.l.b16 %v74
    %v114 = vunpack.c.l.b16 %v75
    %v115 = vunpack.c.l.b16 %v76
    %v116 = vunpack.c.l.b16 %v77
    %v117 = vunpack.c.l.b16 %v78
    %v118 = vpack.c.b16 %v103, %v102
    %v119 = vpack.c.b16 %v105, %v104
    %v120 = vpack.c.b16 %v107, %v106
    %v121 = vpack.c.b16 %v109, %v108
    %v122 = vpack.c.b16 %v111, %v110
    %v123 = vpack.c.b16 %v113, %v112
    %v124 = vpack.c.b16 %v115, %v114
    %v125 = vpack.c.b16 %v117, %v116
    %134 = vmatprep.subr.bf16.mxu0 0
    %135 = vmatpush1.bf16.msra.mxu0 %v118
    %136 = vmatprep.subr.bf16.mxu0 0
    %137 = vmatpush1.bf16.msra.mxu0 %v119
    %138 = vmatprep.subr.bf16.mxu0 0
    %139 = vmatpush1.bf16.msra.mxu0 %v120
    %140 = vmatprep.subr.bf16.mxu0 0
    %141 = vmatpush1.bf16.msra.mxu0 %v121
    %142 = vmatprep.subr.bf16.mxu0 0
    %143 = vmatpush1.bf16.msra.mxu0 %v122
    %144 = vmatprep.subr.bf16.mxu0 0
    %145 = vmatpush1.bf16.msra.mxu0 %v123
    %146 = vmatprep.subr.bf16.mxu0 0
    %147 = vmatpush1.bf16.msra.mxu0 %v124
    %148 = vmatprep.subr.bf16.mxu0 0
    %149 = vmatpush1.bf16.msra.mxu0 %v125
    %150 = vmatprep.subr.bf16.mxu0 0
    %151 = vmatpush1.bf16.msra.mxu0 0
    %152 = vmatprep.subr.bf16.mxu0 0
    %153 = vmatpush1.bf16.msra.mxu0 0
    %154 = vmatprep.subr.bf16.mxu0 0
    %155 = vmatpush1.bf16.msra.mxu0 0
    %156 = vmatprep.subr.bf16.mxu0 0
    %157 = vmatpush1.bf16.msra.mxu0 0
    %158 = vmatprep.subr.bf16.mxu0 0
    %159 = vmatpush1.bf16.msra.mxu0 0
    %160 = vmatprep.subr.bf16.mxu0 0
    %161 = vmatpush1.bf16.msra.mxu0 0
    %162 = vmatprep.subr.bf16.mxu0 0
    %163 = vmatpush1.bf16.msra.mxu0 0
    %164 = vmatprep.subr.bf16.mxu0 0
    %165 = vmatpush1.bf16.msra.mxu0 0
    %166 = vmatprep.mubr.bf16.mxu0 0
    %167 = vmatmul.mubr.bf16.gmra.mrb[0].mxu0 %v62
    %v168 = vpop.f32.mrb[0].mxu0
    %v169 = vadd.f32 %v84, %v168
    %v170 = vpop.f32.mrb[0].mxu0
    %v171 = vpop.f32.mrb[0].mxu0
    %v172 = vpop.f32.mrb[0].mxu0
    %173 = vdwg.mxu0
    %v174 = vmul.f32 %v169, 0.5
    %v175 = vmul.f32 %v169, 0.70710677
    %v176 = verf.f32.pop %v175
    %v177 = vadd.f32 %v176, 1.0
    %v178 = vmul.f32 %v174, %v177
    %v179 = vpack.c.bf16 %v178, %v178
    %v180 = vld [vmem:[#allocation7] sm:$0xf]
    %v181 = vld [vmem:[#allocation7 + $0x4] sm:$0xf]
    %v182 = vld [vmem:[#allocation7 + $0x8] sm:$0xf]
    %v183 = vld [vmem:[#allocation7 + $0xc] sm:$0xf]
    %v184 = vld [vmem:[#allocation7 + $0x10] sm:$0xf]
    %v185 = vld [vmem:[#allocation7 + $0x14] sm:$0xf]
    %v186 = vld [vmem:[#allocation7 + $0x18] sm:$0xf]
    %v187 = vld [vmem:[#allocation7 + $0x1c] sm:$0xf]
    %v188 = vld [vmem:[#allocation7 + $0x20] sm:$0xf]
    %v189 = vld [vmem:[#allocation7 + $0x24] sm:$0xf]
    %v190 = vld [vmem:[#allocation7 + $0x28] sm:$0xf]
    %v191 = vld [vmem:[#allocation7 + $0x2c] sm:$0xf]
    %v192 = vld [vmem:[#allocation7 + $0x30] sm:$0xf]
    %v193 = vld [vmem:[#allocation7 + $0x34] sm:$0xf]
    %v194 = vld [vmem:[#allocation7 + $0x38] sm:$0xf]
    %v195 = vld [vmem:[#allocation7 + $0x3c] sm:$0xf]
    %v196 = vld [vmem:[%s4] sm:$0x1]
    %v198 = vlaneseq
    %v199 = vshrl.u32 %v198, 7
    %v200 = vsub.s32 0, %v199
    %v201 = vrot.slane %v196, %v200
    %v219 = vunpack.c.l.b16 %v180
    %v220 = vunpack.c.l.b16 %v181
    %v221 = vunpack.c.l.b16 %v182
    %v222 = vunpack.c.l.b16 %v183
    %v223 = vunpack.c.l.b16 %v184
    %v224 = vunpack.c.l.b16 %v185
    %v225 = vunpack.c.l.b16 %v186
    %v226 = vunpack.c.l.b16 %v187
    %v227 = vunpack.c.l.b16 %v188
    %v228 = vunpack.c.l.b16 %v189
    %v229 = vunpack.c.l.b16 %v190
    %v230 = vunpack.c.l.b16 %v191
    %v231 = vunpack.c.l.b16 %v192
    %v232 = vunpack.c.l.b16 %v193
    %v233 = vunpack.c.l.b16 %v194
    %v234 = vunpack.c.l.b16 %v195
    %v235 = vpack.c.b16 %v220, %v219
    %v236 = vpack.c.b16 %v222, %v221
    %v237 = vpack.c.b16 %v224, %v223
    %v238 = vpack.c.b16 %v226, %v225
    %v239 = vpack.c.b16 %v228, %v227
    %v240 = vpack.c.b16 %v230, %v229
    %v241 = vpack.c.b16 %v232, %v231
    %v242 = vpack.c.b16 %v234, %v233
    %251 = vmatprep.subr.bf16.mxu0 0
    %252 = vmatpush1.bf16.msra.mxu0 %v235
    %253 = vmatprep.subr.bf16.mxu0 0
    %254 = vmatpush1.bf16.msra.mxu0 %v236
    %255 = vmatprep.subr.bf16.mxu0 0
    %256 = vmatpush1.bf16.msra.mxu0 %v237
    %257 = vmatprep.subr.bf16.mxu0 0
    %258 = vmatpush1.bf16.msra.mxu0 %v238
    %259 = vmatprep.subr.bf16.mxu0 0
    %260 = vmatpush1.bf16.msra.mxu0 %v239
    %261 = vmatprep.subr.bf16.mxu0 0
    %262 = vmatpush1.bf16.msra.mxu0 %v240
    %263 = vmatprep.subr.bf16.mxu0 0
    %264 = vmatpush1.bf16.msra.mxu0 %v241
    %265 = vmatprep.subr.bf16.mxu0 0
    %266 = vmatpush1.bf16.msra.mxu0 %v242
    %267 = vmatprep.subr.bf16.mxu0 0
    %268 = vmatpush1.bf16.msra.mxu0 0
    %269 = vmatprep.subr.bf16.mxu0 0
    %270 = vmatpush1.bf16.msra.mxu0 0
    %271 = vmatprep.subr.bf16.mxu0 0
    %272 = vmatpush1.bf16.msra.mxu0 0
    %273 = vmatprep.subr.bf16.mxu0 0
    %274 = vmatpush1.bf16.msra.mxu0 0
    %275 = vmatprep.subr.bf16.mxu0 0
    %276 = vmatpush1.bf16.msra.mxu0 0
    %277 = vmatprep.subr.bf16.mxu0 0
    %278 = vmatpush1.bf16.msra.mxu0 0
    %279 = vmatprep.subr.bf16.mxu0 0
    %280 = vmatpush1.bf16.msra.mxu0 0
    %281 = vmatprep.subr.bf16.mxu0 0
    %282 = vmatpush1.bf16.msra.mxu0 0
    %283 = vmatprep.mubr.bf16.mxu0 0
    %284 = vmatmul.mubr.bf16.gmra.mrb[0].mxu0 %v179
    %v285 = vpop.f32.mrb[0].mxu0
    %v286 = vadd.f32 %v201, %v285
    %v287 = vpop.f32.mrb[0].mxu0
    %v288 = vpop.f32.mrb[0].mxu0
    %v289 = vpop.f32.mrb[0].mxu0
    %290 = vdwg.mxu0
    %291 = vst [vmem:[#allocation8] sm:$0x3] %v286
    // Predicated region
    $region34: #{tpu_custom_call.1} parent=1 // pred_check
      _
    $region35: #{tpu_custom_call.1} parent=1 // pred_check_branch
      %293 = sbr.rel (0) target = $region37
    $region36: #{tpu_custom_call.1} parent=1 // pred_region
      %s295 = ssub.s32 32, 32
      %296 = vsyncadd [#allocation4], %s295
      %s298 = sshll.u32 [#allocation8], 4
      %s299 = int_to_ptr.vmem [resolvable:$true] %s298
      %301 = dma.vmem_to_hbm [thread:$0]  %s299, 32, %s5, [#allocation4]
    $region37: #{tpu_custom_call.1} parent=1 // pred_fallthru
      _
    // Predicated region
    $region38: #{tpu_custom_call.1} parent=1 // pred_check
      _
    $region39: #{tpu_custom_call.1} parent=1 // pred_check_branch
      %303 = sbr.rel (0) target = $region41
    $region40: #{tpu_custom_call.1} parent=1 // pred_region
      %304 = dma.done [#allocation4], 32
    $region41: #{tpu_custom_call.1} parent=1 // pred_fallthru
      _
    %305 = vsyncpa [#allocation3], 1
    %306 = vsyncpa [#allocation6], 1
    %307 = vsyncpa [#allocation4], 1

</llo_original>
